<compile_context>
chip_gen: v7x
topology: tpu7x:2x2x1
jax: 0.10.0
libtpu: 0.0.40
codegen_flags: <defaults>
</compile_context>

<pallas_src>
import functools

import jax
import jax.numpy as jnp
from jax.experimental import pallas as pl
from jax.experimental.pallas import tpu as pltpu

LANE = 128            # padded channel width (lane-dense layout)
DEG_LANE = LANE - 1   # spare lane carrying the row degree through the MXU
TM_MAX = 256          # target-row tile  (parallel grid axis)
TK_MAX = 512          # source-row tile  (arbitrary / reduction grid axis)
VMEM_LIMIT = 32 * 1024 * 1024


def _round_up(x, m):
    return ((x + m - 1) // m) * m


def _pick_tiles(n_tgt, n_src):
    """Tile sizes + padded extents for one layer (bf16 tiling: x16, x128)."""
    tm = min(TM_MAX, _round_up(n_tgt, 16))
    tk = min(TK_MAX, _round_up(n_src, 128))
    return tm, tk, _round_up(n_tgt, tm), _round_up(n_src, tk)


# --------------------------------------------------------------------------
# One fused SAGEConv layer: mean-aggregate (tiled reduction) + transform
# + activation (ReLU or masked log_softmax)
# --------------------------------------------------------------------------
def _sage_layer_kernel(adj_ref, xs_ref, xt_ref, w_ref, b_ref, o_ref, acc_ref,
                       *, apply_relu, num_classes):
    k = pl.program_id(1)

    @pl.when(k == 0)
    def _():
        acc_ref[...] = jnp.zeros_like(acc_ref)

    # Aggregation matmul (bf16 in, f32 accumulate).  Lane DEG_LANE of the
    # source features is 1.0, so the row degree rides this matmul for free.
    acc_ref[...] += jnp.dot(adj_ref[...], xs_ref[...],
                            preferred_element_type=jnp.float32)

    @pl.when(k == pl.num_programs(1) - 1)
    def _():
        agg = acc_ref[...]                                   # [tm, LANE] f32
        deg = agg[:, DEG_LANE:DEG_LANE + 1]                  # [tm, 1] degree
        inv = pl.reciprocal(jnp.maximum(deg, 1.0), approx=True)   # EUP slot
        agg = (agg * inv).astype(jnp.bfloat16)               # mean aggregation
        # Fused transform: [agg | x_target] @ [[W_l],[W_r]] (one K=256 matmul;
        # v5e's 128-deep MXU just runs it as two 128-deep passes).
        cat = jnp.concatenate([agg, xt_ref[...]], axis=-1)   # [tm, 2*LANE] bf16
        out = jnp.dot(cat, w_ref[...],
                      preferred_element_type=jnp.float32) + b_ref[...]
        if apply_relu:
            # bias holds 1.0 at DEG_LANE, so ReLU(0+1)=1 keeps the ones-lane
            # the next layer needs for its MXU degree trick.
            o_ref[...] = jnp.maximum(out, 0.0).astype(o_ref.dtype)
        else:
            # masked log_softmax over the first num_classes lanes
            col = jax.lax.broadcasted_iota(jnp.int32, out.shape, 1)
            valid = col < num_classes
            zm = jnp.where(valid, out, jnp.float32(-1e30))
            m = jnp.max(zm, axis=-1, keepdims=True)
            z = zm - m
            lse = jnp.log(jnp.sum(jnp.where(valid, jnp.exp(z), 0.0),
                                  axis=-1, keepdims=True))
            o_ref[...] = jnp.where(valid, z - lse, 0.0).astype(o_ref.dtype)


def _sage_layer(adj, x_src, x_tgt, w, b, *, n_tgt_pad, n_src_pad, tm, tk,
                apply_relu, num_classes, out_dtype):
    grid = (n_tgt_pad // tm, n_src_pad // tk)
    out_bytes = jnp.dtype(out_dtype).itemsize
    cost = pl.CostEstimate(
        flops=2 * n_tgt_pad * n_src_pad * LANE
        + 2 * n_tgt_pad * (2 * LANE) * LANE,
        transcendentals=n_tgt_pad * (1 if apply_relu else LANE + 1),
        bytes_accessed=(n_tgt_pad * n_src_pad * 2       # adjacency (bf16)
                        + n_src_pad * LANE * 2          # source features
                        + n_tgt_pad * LANE * 2          # target features
                        + 2 * LANE * LANE * 2 + LANE * 4
                        + n_tgt_pad * LANE * out_bytes))
    kernel = functools.partial(_sage_layer_kernel,
                               apply_relu=apply_relu, num_classes=num_classes)
    return pl.pallas_call(
        kernel,
        out_shape=jax.ShapeDtypeStruct((n_tgt_pad, LANE), out_dtype),
        grid_spec=pltpu.PrefetchScalarGridSpec(
            num_scalar_prefetch=0,
            grid=grid,
            in_specs=[
                pl.BlockSpec((tm, tk), lambda i, k: (i, k)),          # adj tile
                pl.BlockSpec((tk, LANE), lambda i, k: (k, 0)),        # src feats
                pl.BlockSpec((tm, LANE), lambda i, k: (i, 0)),        # tgt feats
                pl.BlockSpec((2 * LANE, LANE), lambda i, k: (0, 0)),  # [W_l;W_r]
                pl.BlockSpec((1, LANE), lambda i, k: (0, 0)),         # bias
            ],
            out_specs=pl.BlockSpec((tm, LANE), lambda i, k: (i, 0)),
            scratch_shapes=[pltpu.VMEM((tm, LANE), jnp.float32)]),
        compiler_params=pltpu.CompilerParams(
            dimension_semantics=("parallel", "arbitrary"),
            vmem_limit_bytes=VMEM_LIMIT),
        cost_estimate=cost,
    )(adj, x_src, x_tgt, w, b)


# --------------------------------------------------------------------------
# Host-side glue
# --------------------------------------------------------------------------
def _pad2d(a, rows, cols):
    return jnp.zeros((rows, cols), a.dtype).at[:a.shape[0], :a.shape[1]].set(a)


def count_adjacency(edge_index, num_src, num_tgt):
    """edge_index[0]=source j, edge_index[1]=target i; A[i,j] = #edges j->i.
    Row-normalizing by the degree inside the kernel reproduces PyG scatter-mean
    (duplicate edges counted with multiplicity; isolated targets -> 0).
    NOTE: bf16 adjacency entries are exact only for multiplicities <= 256."""
    src, tgt = edge_index[0], edge_index[1]
    return jnp.zeros((num_tgt, num_src), jnp.float32).at[tgt, src].add(1.0)
    # TODO(synk): at realistic NeighborSampler batch sizes, replace the dense-A
    #             matmul with a PrefetchScalarGridSpec gather-based aggregation
    #             (neighbor indices in SMEM, per-target-tile accumulation).


def pack_sagenet_params(params, num_classes):
    """Pad channels to LANE, stack [W_l; W_r] per layer, cast MXU ops to bf16."""
    in_c = params[0]["w_l"].shape[0]
    hid_c = params[0]["w_l"].shape[1]
    out_c = params[1]["w_l"].shape[1]
    assert in_c <= DEG_LANE and hid_c <= DEG_LANE and out_c <= DEG_LANE

    def pack_layer(p, carry_ones_lane):
        w_l = _pad2d(p["w_l"], LANE, LANE)
        w_r = _pad2d(p["w_r"], LANE, LANE)
        w = jnp.concatenate([w_l, w_r], axis=0).astype(jnp.bfloat16)  # [2L, L]
        b = _pad2d(p["b_l"], 1, LANE)
        if carry_ones_lane:
            b = b.at[0, DEG_LANE].set(1.0)   # output carries the ones-lane
        return w, b.astype(jnp.float32)

    w1, b1 = pack_layer(params[0], True)
    w2, b2 = pack_layer(params[1], False)
    return {"w1": w1, "b1": b1, "w2": w2, "b2": b2, "num_classes": num_classes}


def sagenet_forward(x, adjs, packed):
    """x: [n0, in_channels] f32; adjs: 2-hop NeighborSampler batch
    [(edge_index, (num_src, num_tgt)), ...].  Assumes NeighborSampler ordering:
    target nodes are the leading rows of their source set (x_target = x[:nt])."""
    (ei1, (n0, n1)), (ei2, (_n1, n2)) = adjs
    assert x.shape[0] == n0 and _n1 == n1
    assert n1 <= n0 and n2 <= n1

    num_classes = packed["num_classes"]
    in_c = x.shape[1]

    # per-layer tiling: target rows -> parallel axis, source rows -> reduction
    tm1, tk1, n1p, n0p = _pick_tiles(n1, n0)
    tm2, tk2, n2p, n1sp = _pick_tiles(n2, n1)

    # ---------------- layer 1: SAGEConv(in -> hidden) + ReLU -----------------
    r1 = max(n0p, n1p)
    x_pad = (jnp.zeros((r1, LANE), jnp.float32)
             .at[:n0, :in_c].set(x)
             .at[:, DEG_LANE].set(1.0)          # ones-lane -> degree via MXU
             .astype(jnp.bfloat16))
    adj1 = count_adjacency(ei1, n0p, n1p).astype(jnp.bfloat16)     # [n1p, n0p]

    h = _sage_layer(adj1, x_pad, x_pad, packed["w1"], packed["b1"],
                    n_tgt_pad=n1p, n_src_pad=n0p, tm=tm1, tk=tk1,
                    apply_relu=True, num_classes=None,
                    out_dtype=jnp.bfloat16)      # [n1p, LANE], lane127 == 1.0
    # TODO(synk): F.dropout(p=0.5) is identity in eval mode; if training is
    #             ever needed, fuse it here with pltpu.prng_seed/prng_random_bits.

    # ---------------- layer 2: SAGEConv(hidden -> out) + log_softmax ---------
    r2 = max(n1sp, n2p)
    if h.shape[0] < r2:
        h = jnp.concatenate([h, jnp.zeros((r2 - h.shape[0], LANE), h.dtype)], 0)
    adj2 = count_adjacency(ei2, n1sp, n2p).astype(jnp.bfloat16)    # [n2p, n1sp]

    logits = _sage_layer(adj2, h, h, packed["w2"], packed["b2"],
                         n_tgt_pad=n2p, n_src_pad=n1sp, tm=tm2, tk=tk2,
                         apply_relu=False, num_classes=num_classes,
                         out_dtype=jnp.float32)  # [n2p, LANE], log_softmax'd
    return logits[:n2, :num_classes]


# --------------------------------------------------------------------------
# Pure-JAX reference (f32) for validation
# --------------------------------------------------------------------------
def sagenet_reference(x, adjs, params):
    num_layers = len(adjs)
    for i, (edge_index, (ns, nt)) in enumerate(adjs):
        a = count_adjacency(edge_index, ns, nt)
        deg = jnp.maximum(jnp.sum(a, axis=1, keepdims=True), 1.0)
        agg = (a @ x) / deg
        x_t = x[:nt]
        h = agg @ params[i]["w_l"] + x_t @ params[i]["w_r"] + params[i]["b_l"]
        if i != num_layers - 1:
            h = jax.nn.relu(h)
        x = h
    return jax.nn.log_softmax(x, axis=-1)


# --------------------------------------------------------------------------
# Deterministic parameter init (SAGEConv shapes) + synthetic 2-hop batch
# --------------------------------------------------------------------------
def init_sageconv(key, in_channels, out_channels):
    k1, k2, k3 = jax.random.split(key, 3)
    s = (6.0 / (in_channels + out_channels)) ** 0.5
    w_l = jax.random.uniform(k1, (in_channels, out_channels), jnp.float32, -s, s)
    w_r = jax.random.uniform(k2, (in_channels, out_channels), jnp.float32, -s, s)
    b_l = jax.random.uniform(k3, (1, out_channels), jnp.float32, -0.1, 0.1)
    return {"w_l": w_l, "w_r": w_r, "b_l": b_l}


if __name__ == "__main__":
    in_channels, hidden_channels, out_channels = 16, 32, 8

    # Node counts mimicking a 2-hop NeighborSampler batch:
    #   layer-1: 64 source nodes -> 32 target nodes
    #   layer-2: 32 source nodes -> 16 target nodes
    n0, n1, n2 = 64, 32, 16
    e1, e2 = 128, 64

    root = jax.random.PRNGKey(0)
    kx, ke1s, ke1t, ke2s, ke2t, kp1, kp2 = jax.random.split(root, 7)

    x = jax.random.normal(kx, (n0, in_channels), jnp.float32)

    edge_index_1 = jnp.stack([
        jax.random.randint(ke1s, (e1,), 0, n0, jnp.int32),   # sources
        jax.random.randint(ke1t, (e1,), 0, n1, jnp.int32),   # targets
    ])
    edge_index_2 = jnp.stack([
        jax.random.randint(ke2s, (e2,), 0, n1, jnp.int32),
        jax.random.randint(ke2t, (e2,), 0, n2, jnp.int32),
    ])
    adjs = [(edge_index_1, (n0, n1)), (edge_index_2, (n1, n2))]

    params = [
        init_sageconv(kp1, in_channels, hidden_channels),
        init_sageconv(kp2, hidden_channels, out_channels),
    ]
    packed = pack_sagenet_params(params, out_channels)

    out = sagenet_forward(x, adjs, packed)
    out = jax.block_until_ready(out)

    assert out.shape == (n2, out_channels)
    # log_softmax rows should sum (in prob space) to 1
    assert bool(jnp.allclose(jnp.sum(jnp.exp(out), axis=-1), 1.0, atol=1e-3))
    # match the f32 pure-JAX reference (bf16 MXU inputs + approx reciprocal)
    ref = sagenet_reference(x, adjs, params)
    max_err = float(jnp.max(jnp.abs(out - ref)))
    assert max_err < 0.2, f"max |kernel - reference| = {max_err}"
    print("KERNEL_OK")
</pallas_src>

<mosaic_0001>
module attributes {stable_mosaic.version = 11 : i64} {
  func.func @_sage_layer_kernel(%arg0: i32, %arg1: i32, %arg2: memref<32x128xbf16, #tpu.memory_space<vmem>>, %arg3: memref<128x128xbf16, #tpu.memory_space<vmem>>, %arg4: memref<32x128xbf16, #tpu.memory_space<vmem>>, %arg5: memref<256x128xbf16, #tpu.memory_space<vmem>>, %arg6: memref<1x128xf32, #tpu.memory_space<vmem>>, %arg7: memref<32x128xbf16, #tpu.memory_space<vmem>>, %arg8: memref<32x128xf32, #tpu.memory_space<vmem>>) attributes {dimension_semantics = [#tpu.dimension_semantics<parallel>, #tpu.dimension_semantics<arbitrary>], iteration_bounds = array<i64: 1, 1>, scalar_prefetch = 0 : i64, scratch_operands = 1 : i64, tpu.core_type = #tpu.core_type<tc>, window_params = [{transform_indices = @transform_0, window_bounds = array<i64: 32, 128>}, {transform_indices = @transform_1, window_bounds = array<i64: 128, 128>}, {transform_indices = @transform_2, window_bounds = array<i64: 32, 128>}, {pipeline_mode = #tpu.pipeline_mode<synchronous>, transform_indices = @transform_3, window_bounds = array<i64: 256, 128>}, {pipeline_mode = #tpu.pipeline_mode<synchronous>, transform_indices = @transform_4, window_bounds = array<i64: 1, 128>}, {transform_indices = @transform_5, window_bounds = array<i64: 32, 128>}]} {
    %c0_i32 = arith.constant 0 : i32
    %0 = arith.cmpi eq, %arg1, %c0_i32 : i32
    %1 = arith.extui %0 : i1 to i32
    %c0_i32_0 = arith.constant 0 : i32
    %2 = arith.cmpi ne, %1, %c0_i32_0 : i32
    scf.if %2 {
      %cst_10 = arith.constant 0.000000e+00 : f32
      %12 = vector.broadcast %cst_10 : f32 to vector<32x128xf32>
      %c0_11 = arith.constant 0 : index
      %c0_12 = arith.constant 0 : index
      %13 = vector.load %arg8[%c0_11, %c0_12] : memref<32x128xf32, #tpu.memory_space<vmem>>, vector<32x128xf32>
      tpu.vector_store %arg8[%c0_11, %c0_12], %12 {strides = array<i32>} : memref<32x128xf32, #tpu.memory_space<vmem>>, vector<32x128xf32>,
    } else {
    }
    %c0 = arith.constant 0 : index
    %c0_1 = arith.constant 0 : index
    %3 = vector.load %arg8[%c0, %c0_1] : memref<32x128xf32, #tpu.memory_space<vmem>>, vector<32x128xf32>
    %c0_2 = arith.constant 0 : index
    %c0_3 = arith.constant 0 : index
    %4 = vector.load %arg2[%c0_2, %c0_3] : memref<32x128xbf16, #tpu.memory_space<vmem>>, vector<32x128xbf16>
    %c0_4 = arith.constant 0 : index
    %c0_5 = arith.constant 0 : index
    %5 = vector.load %arg3[%c0_4, %c0_5] : memref<128x128xbf16, #tpu.memory_space<vmem>>, vector<128x128xbf16>
    %cst = arith.constant dense<0.000000e+00> : vector<32x128xf32>
    %6 = tpu.matmul %4, %5, %cst {dimension_numbers = #tpu.dot_dimension_numbers<[1], [0], [0], [1], [0, 0, 1, 1], [], []>} : vector<32x128xbf16>, vector<128x128xbf16>, vector<32x128xf32> -> vector<32x128xf32>
    %7 = arith.addf %3, %6 : vector<32x128xf32>
    %c0_6 = arith.constant 0 : index
    %c0_7 = arith.constant 0 : index
    %8 = vector.load %arg8[%c0_6, %c0_7] : memref<32x128xf32, #tpu.memory_space<vmem>>, vector<32x128xf32>
    tpu.vector_store %arg8[%c0_6, %c0_7], %7 {strides = array<i32>} : memref<32x128xf32, #tpu.memory_space<vmem>>, vector<32x128xf32>,
    %c0_i32_8 = arith.constant 0 : i32
    %9 = arith.cmpi eq, %arg1, %c0_i32_8 : i32
    %10 = arith.extui %9 : i1 to i32
    %c0_i32_9 = arith.constant 0 : i32
    %11 = arith.cmpi ne, %10, %c0_i32_9 : i32
    scf.if %11 {
      %c0_10 = arith.constant 0 : index
      %c0_11 = arith.constant 0 : index
      %12 = vector.load %arg8[%c0_10, %c0_11] : memref<32x128xf32, #tpu.memory_space<vmem>>, vector<32x128xf32>
      %13 = vector.extract_strided_slice %12 {offsets = [0, 127], sizes = [32, 1], strides = [1, 1]} : vector<32x128xf32> to vector<32x1xf32>
      %cst_12 = arith.constant 1.000000e+00 : f32
      %14 = vector.broadcast %cst_12 : f32 to vector<32x1xf32>
      %15 = arith.maximumf %13, %14 : vector<32x1xf32>
      %16 = tpu.reciprocal %15 {approx = true} : vector<32x1xf32> -> vector<32x1xf32>
      %17 = vector.broadcast %16 : vector<32x1xf32> to vector<32x128xf32>
      %18 = arith.mulf %12, %17 : vector<32x128xf32>
      %19 = arith.truncf %18 : vector<32x128xf32> to vector<32x128xbf16>
      %c0_13 = arith.constant 0 : index
      %c0_14 = arith.constant 0 : index
      %20 = vector.load %arg4[%c0_13, %c0_14] : memref<32x128xbf16, #tpu.memory_space<vmem>>, vector<32x128xbf16>
      %21 = tpu.concatenate %19, %20 in 1 : vector<32x128xbf16>, vector<32x128xbf16> -> vector<32x256xbf16>
      %c0_15 = arith.constant 0 : index
      %c0_16 = arith.constant 0 : index
      %22 = vector.load %arg5[%c0_15, %c0_16] : memref<256x128xbf16, #tpu.memory_space<vmem>>, vector<256x128xbf16>
      %cst_17 = arith.constant dense<0.000000e+00> : vector<32x128xf32>
      %23 = tpu.matmul %21, %22, %cst_17 {dimension_numbers = #tpu.dot_dimension_numbers<[1], [0], [0], [1], [0, 0, 1, 1], [], []>} : vector<32x256xbf16>, vector<256x128xbf16>, vector<32x128xf32> -> vector<32x128xf32>
      %c0_18 = arith.constant 0 : index
      %c0_19 = arith.constant 0 : index
      %24 = vector.load %arg6[%c0_18, %c0_19] : memref<1x128xf32, #tpu.memory_space<vmem>>, vector<1x128xf32>
      %25 = vector.broadcast %24 : vector<1x128xf32> to vector<32x128xf32>
      %26 = arith.addf %23, %25 : vector<32x128xf32>
      %cst_20 = arith.constant 0.000000e+00 : f32
      %27 = vector.broadcast %cst_20 : f32 to vector<32x128xf32>
      %28 = arith.maximumf %26, %27 : vector<32x128xf32>
      %29 = arith.truncf %28 : vector<32x128xf32> to vector<32x128xbf16>
      %c0_21 = arith.constant 0 : index
      %c0_22 = arith.constant 0 : index
      %30 = vector.load %arg7[%c0_21, %c0_22] : memref<32x128xbf16, #tpu.memory_space<vmem>>, vector<32x128xbf16>
      tpu.vector_store %arg7[%c0_21, %c0_22], %29 {strides = array<i32>} : memref<32x128xbf16, #tpu.memory_space<vmem>>, vector<32x128xbf16>,
    } else {
    }
    return
  }
  func.func @transform_0(%arg0: i32, %arg1: i32) -> (i32, i32) {
    %c0_i32 = arith.constant 0 : i32
    return %arg0, %arg1 : i32, i32
  }
  func.func @transform_1(%arg0: i32, %arg1: i32) -> (i32, i32) {
    %c0_i32 = arith.constant 0 : i32
    %c0_i32_0 = arith.constant 0 : i32
    return %arg1, %c0_i32 : i32, i32
  }
  func.func @transform_2(%arg0: i32, %arg1: i32) -> (i32, i32) {
    %c0_i32 = arith.constant 0 : i32
    %c0_i32_0 = arith.constant 0 : i32
    return %arg0, %c0_i32 : i32, i32
  }
  func.func @transform_3(%arg0: i32, %arg1: i32) -> (i32, i32) {
    %c0_i32 = arith.constant 0 : i32
    %c0_i32_0 = arith.constant 0 : i32
    %c0_i32_1 = arith.constant 0 : i32
    return %c0_i32, %c0_i32_0 : i32, i32
  }
  func.func @transform_4(%arg0: i32, %arg1: i32) -> (i32, i32) {
    %c0_i32 = arith.constant 0 : i32
    %c0_i32_0 = arith.constant 0 : i32
    %c0_i32_1 = arith.constant 0 : i32
    return %c0_i32, %c0_i32_0 : i32, i32
  }
  func.func @transform_5(%arg0: i32, %arg1: i32) -> (i32, i32) {
    %c0_i32 = arith.constant 0 : i32
    %c0_i32_0 = arith.constant 0 : i32
    return %arg0, %c0_i32 : i32, i32
  }
}

</mosaic_0001>

<llo_original>
// kernel: tpu_custom_call.1
$region0: #{tpu_custom_call.1}
  #allocation0 [shape = 'u32[]', space=smem, size = 0x4, offset = 0x4, fixed_abs, tag = 'smem constant byte address 0x4 - core index']
  #allocation1 [shape = 'u32[144,128]{1,0:T(1,128)}', space=vmem, size = 0x12000, scoped, tag = 'internal scratch']
  #allocation2 [shape = 'f32[32,128]{1,0:T(8,128)}', space=vmem, size = 0x4000, scoped, tag = 'scratch operand']
  %s0 = inlined_call_operand.hbm [shape: bf16[32,128], index: 0, kind: input, shape index: {}]
  %s1 = inlined_call_operand.hbm [shape: bf16[128,128], index: 1, kind: input, shape index: {}]
  %s2 = inlined_call_operand.hbm [shape: bf16[128,128], index: 2, kind: input, shape index: {}]
  %s3 = inlined_call_operand.hbm [shape: bf16[256,128], index: 3, kind: input, shape index: {}]
  %s4 = inlined_call_operand.vmem [shape: f32[1,128], index: 4, kind: input, shape index: {}]
  %s5 = inlined_call_operand.hbm [shape: bf16[32,128], index: 5, kind: output, shape index: {}]
  %s6 = sld [smem:[#allocation0]]
  $region54: #{tpu_custom_call.1} parent=0
    _
  %s8 = ssub.s32 1, %s6
  %s9 = scalar_select 0, %s8, %s6
  $region1: #{tpu_custom_call.1} parent=0
    #allocation3 [shape = 'u8[8192]{0}', space=vmem, size = 0x2000, scoped, tag = 'input window, operand 0, single buffered']
    #allocation4 [shape = 's32[1]{0}', space=sflag, size = 0x4, scoped, tag = 'scoped memory for tpu_custom_call.1']
    #allocation5 [shape = 's32[1]{0}', space=sflag, size = 0x4, scoped, tag = 'scoped memory for tpu_custom_call.1']
    #allocation6 [shape = 'u8[32768]{0}', space=vmem, size = 0x8000, scoped, tag = 'input window, operand 1, single buffered']
    #allocation7 [shape = 's32[1]{0}', space=sflag, size = 0x4, scoped, tag = 'scoped memory for tpu_custom_call.1']
    #allocation8 [shape = 'u8[8192]{0}', space=vmem, size = 0x2000, scoped, tag = 'input window, operand 2, single buffered']
    #allocation9 [shape = 'u8[65536]{0}', space=vmem, size = 0x10000, scoped, tag = 'input window, operand 3, single buffered']
    #allocation10 [shape = 's32[1]{0}', space=sflag, size = 0x4, scoped, tag = 'scoped memory for tpu_custom_call.1']
    #allocation11 [shape = 'u8[8192]{0}', space=vmem, size = 0x2000, scoped, tag = 'output window, operand 0, single buffered']
    %10 = vsyncpa [#allocation4], 0
    %11 = vsyncpa [#allocation7], 0
    %12 = vsyncpa [#allocation10], 0
    %13 = vsyncpa [#allocation5], 0
    // Predicated region
    $region2: #{tpu_custom_call.1} parent=1 // pred_check
      _
    $region3: #{tpu_custom_call.1} parent=1 // pred_check_branch
      %15 = sbr.rel (0) target = $region5
    $region4: #{tpu_custom_call.1} parent=1 // pred_region
      %s17 = ssub.s32 256, 256
      %18 = vsyncadd [#allocation4], %s17
      %s19 = sshll.u32 [#allocation3], 4
      %s20 = int_to_ptr.vmem [resolvable:$true] %s19
      %25 = dma.hbm_to_vmem [thread:$0]  %s0, 256, %s20, [#allocation4], 64, 64, 4
    $region5: #{tpu_custom_call.1} parent=1 // pred_fallthru
      _
    // Predicated region
    $region6: #{tpu_custom_call.1} parent=1 // pred_check
      _
    $region7: #{tpu_custom_call.1} parent=1 // pred_check_branch
      %27 = sbr.rel (0) target = $region9
    $region8: #{tpu_custom_call.1} parent=1 // pred_region
      %s29 = ssub.s32 1024, 1024
      %30 = vsyncadd [#allocation7], %s29
      %s31 = sshll.u32 [#allocation6], 4
      %s32 = int_to_ptr.vmem [resolvable:$true] %s31
      %37 = dma.hbm_to_vmem [thread:$0]  %s1, 1024, %s32, [#allocation7], 64, 64, 4
    $region9: #{tpu_custom_call.1} parent=1 // pred_fallthru
      _
    // Predicated region
    $region10: #{tpu_custom_call.1} parent=1 // pred_check
      _
    $region11: #{tpu_custom_call.1} parent=1 // pred_check_branch
      %39 = sbr.rel (0) target = $region13
    $region12: #{tpu_custom_call.1} parent=1 // pred_region
      %s41 = ssub.s32 256, 256
      %42 = vsyncadd [#allocation7], %s41
      %s43 = sshll.u32 [#allocation8], 4
      %s44 = int_to_ptr.vmem [resolvable:$true] %s43
      %49 = dma.hbm_to_vmem [thread:$0]  %s2, 256, %s44, [#allocation7], 64, 64, 4
    $region13: #{tpu_custom_call.1} parent=1 // pred_fallthru
      _
    // Predicated region
    $region14: #{tpu_custom_call.1} parent=1 // pred_check
      _
    $region15: #{tpu_custom_call.1} parent=1 // pred_check_branch
      %51 = sbr.rel (0) target = $region17
    $region16: #{tpu_custom_call.1} parent=1 // pred_region
      %s53 = ssub.s32 2048, 2048
      %54 = vsyncadd [#allocation10], %s53
      %s55 = sshll.u32 [#allocation9], 4
      %s56 = int_to_ptr.vmem [resolvable:$true] %s55
      %61 = dma.hbm_to_vmem [thread:$0]  %s3, 2048, %s56, [#allocation10], 64, 64, 4
    $region17: #{tpu_custom_call.1} parent=1 // pred_fallthru
      _
    // Predicated region
    $region18: #{tpu_custom_call.1} parent=1 // pred_check
      _
    $region19: #{tpu_custom_call.1} parent=1 // pred_check_branch
      %63 = sbr.rel (0) target = $region21
    $region20: #{tpu_custom_call.1} parent=1 // pred_region
      _
    $region21: #{tpu_custom_call.1} parent=1 // pred_fallthru
      _
    // Predicated region
    $region22: #{tpu_custom_call.1} parent=1 // pred_check
      _
    $region23: #{tpu_custom_call.1} parent=1 // pred_check_branch
      %65 = sbr.rel (0) target = $region25
    $region24: #{tpu_custom_call.1} parent=1 // pred_region
      %66 = dma.done [#allocation4], 256
    $region25: #{tpu_custom_call.1} parent=1 // pred_fallthru
      _
    // Predicated region
    $region26: #{tpu_custom_call.1} parent=1 // pred_check
      _
    $region27: #{tpu_custom_call.1} parent=1 // pred_check_branch
      %68 = sbr.rel (0) target = $region29
    $region28: #{tpu_custom_call.1} parent=1 // pred_region
      %69 = dma.done [#allocation7], 1024
    $region29: #{tpu_custom_call.1} parent=1 // pred_fallthru
      _
    // Predicated region
    $region30: #{tpu_custom_call.1} parent=1 // pred_check
      _
    $region31: #{tpu_custom_call.1} parent=1 // pred_check_branch
      %71 = sbr.rel (0) target = $region33
    $region32: #{tpu_custom_call.1} parent=1 // pred_region
      %72 = dma.done [#allocation7], 256
    $region33: #{tpu_custom_call.1} parent=1 // pred_fallthru
      _
    // Predicated region
    $region34: #{tpu_custom_call.1} parent=1 // pred_check
      _
    $region35: #{tpu_custom_call.1} parent=1 // pred_check_branch
      %74 = sbr.rel (0) target = $region37
    $region36: #{tpu_custom_call.1} parent=1 // pred_region
      %75 = dma.done [#allocation10], 2048
    $region37: #{tpu_custom_call.1} parent=1 // pred_fallthru
      _
    %p77 = scmp.eq.s32.totalorder 0, 0
    // Predicated region
    $region38: #{tpu_custom_call.1} parent=1 // pred_check
      %p78 = pneg %p77
    $region39: #{tpu_custom_call.1} parent=1 // pred_check_branch
      %80 = sbr.rel (%p78) target = $region41
    $region40: #{tpu_custom_call.1} parent=1 // pred_region
      %81 = vst [vmem:[#allocation2] sm:$0xff] 0.0
      %82 = vst [vmem:[#allocation2 + $0x8] sm:$0xff] 0.0
      %83 = vst [vmem:[#allocation2 + $0x10] sm:$0xff] 0.0
      %84 = vst [vmem:[#allocation2 + $0x18] sm:$0xff] 0.0
    $region41: #{tpu_custom_call.1} parent=1 // pred_fallthru
      _
    %v85 = vld [vmem:[#allocation2] sm:$0xff]
    %v86 = vld [vmem:[#allocation2 + $0x8] sm:$0xff]
    %v87 = vld [vmem:[#allocation2 + $0x10] sm:$0xff]
    %v88 = vld [vmem:[#allocation2 + $0x18] sm:$0xff]
    %v89 = vld [vmem:[#allocation3] sm:$0xf]
    %v90 = vld [vmem:[#allocation3 + $0x4] sm:$0xf]
    %v91 = vld [vmem:[#allocation3 + $0x8] sm:$0xf]
    %v92 = vld [vmem:[#allocation3 + $0xc] sm:$0xf]
    %v93 = vld [vmem:[#allocation6] sm:$0xf]
    %v94 = vld [vmem:[#allocation6 + $0x4] sm:$0xf]
    %v95 = vld [vmem:[#allocation6 + $0x8] sm:$0xf]
    %v96 = vld [vmem:[#allocation6 + $0xc] sm:$0xf]
    %v97 = vld [vmem:[#allocation6 + $0x10] sm:$0xf]
    %v98 = vld [vmem:[#allocation6 + $0x14] sm:$0xf]
    %v99 = vld [vmem:[#allocation6 + $0x18] sm:$0xf]
    %v100 = vld [vmem:[#allocation6 + $0x1c] sm:$0xf]
    %v101 = vld [vmem:[#allocation6 + $0x20] sm:$0xf]
    %v102 = vld [vmem:[#allocation6 + $0x24] sm:$0xf]
    %v103 = vld [vmem:[#allocation6 + $0x28] sm:$0xf]
    %v104 = vld [vmem:[#allocation6 + $0x2c] sm:$0xf]
    %v105 = vld [vmem:[#allocation6 + $0x30] sm:$0xf]
    %v106 = vld [vmem:[#allocation6 + $0x34] sm:$0xf]
    %v107 = vld [vmem:[#allocation6 + $0x38] sm:$0xf]
    %v108 = vld [vmem:[#allocation6 + $0x3c] sm:$0xf]
    %v113 = vunpack.c.l.b16 %v89
    %v114 = vunpack.c.l.b16 %v90
    %v115 = vunpack.c.l.b16 %v91
    %v116 = vunpack.c.l.b16 %v92
    %v117 = vpack.c.b16 %v114, %v113
    %v118 = vpack.c.b16 %v116, %v115
    %v137 = vunpack.c.l.b16 %v93
    %v138 = vunpack.c.l.b16 %v94
    %v139 = vunpack.c.l.b16 %v95
    %v140 = vunpack.c.l.b16 %v96
    %v141 = vunpack.c.l.b16 %v97
    %v142 = vunpack.c.l.b16 %v98
    %v143 = vunpack.c.l.b16 %v99
    %v144 = vunpack.c.l.b16 %v100
    %v145 = vunpack.c.l.b16 %v101
    %v146 = vunpack.c.l.b16 %v102
    %v147 = vunpack.c.l.b16 %v103
    %v148 = vunpack.c.l.b16 %v104
    %v149 = vunpack.c.l.b16 %v105
    %v150 = vunpack.c.l.b16 %v106
    %v151 = vunpack.c.l.b16 %v107
    %v152 = vunpack.c.l.b16 %v108
    %v153 = vpack.c.b16 %v138, %v137
    %v154 = vpack.c.b16 %v140, %v139
    %v155 = vpack.c.b16 %v142, %v141
    %v156 = vpack.c.b16 %v144, %v143
    %v157 = vpack.c.b16 %v146, %v145
    %v158 = vpack.c.b16 %v148, %v147
    %v159 = vpack.c.b16 %v150, %v149
    %v160 = vpack.c.b16 %v152, %v151
    %169 = vmatprep.subr.bf16.mxu0 0
    %170 = vmatpush1.bf16.msra.mxu0 %v153
    %171 = vmatprep.subr.bf16.mxu0 0
    %172 = vmatpush1.bf16.msra.mxu0 %v154
    %173 = vmatprep.subr.bf16.mxu0 0
    %174 = vmatpush1.bf16.msra.mxu0 %v155
    %175 = vmatprep.subr.bf16.mxu0 0
    %176 = vmatpush1.bf16.msra.mxu0 %v156
    %177 = vmatprep.subr.bf16.mxu0 0
    %178 = vmatpush1.bf16.msra.mxu0 %v157
    %179 = vmatprep.subr.bf16.mxu0 0
    %180 = vmatpush1.bf16.msra.mxu0 %v158
    %181 = vmatprep.subr.bf16.mxu0 0
    %182 = vmatpush1.bf16.msra.mxu0 %v159
    %183 = vmatprep.subr.bf16.mxu0 0
    %184 = vmatpush1.bf16.msra.mxu0 %v160
    %185 = vmatprep.subr.bf16.mxu0 0
    %186 = vmatpush1.bf16.msra.mxu0 0
    %187 = vmatprep.subr.bf16.mxu0 0
    %188 = vmatpush1.bf16.msra.mxu0 0
    %189 = vmatprep.subr.bf16.mxu0 0
    %190 = vmatpush1.bf16.msra.mxu0 0
    %191 = vmatprep.subr.bf16.mxu0 0
    %192 = vmatpush1.bf16.msra.mxu0 0
    %193 = vmatprep.subr.bf16.mxu0 0
    %194 = vmatpush1.bf16.msra.mxu0 0
    %195 = vmatprep.subr.bf16.mxu0 0
    %196 = vmatpush1.bf16.msra.mxu0 0
    %197 = vmatprep.subr.bf16.mxu0 0
    %198 = vmatpush1.bf16.msra.mxu0 0
    %199 = vmatprep.subr.bf16.mxu0 0
    %200 = vmatpush1.bf16.msra.mxu0 0
    %201 = vmatprep.mubr.bf16.mxu0 0
    %202 = vmatmul.mubr.bf16.gmra.mrb[0].mxu0 %v117
    %v203 = vpop.f32.mrb[0].mxu0
    %v204 = vadd.f32 0.0, %v203
    %v205 = vpop.f32.mrb[0].mxu0
    %v206 = vpop.f32.mrb[0].mxu0
    %v207 = vadd.f32 0.0, %v206
    %v208 = vpop.f32.mrb[0].mxu0
    %209 = vmatprep.mubr.bf16.mxu0 0
    %210 = vmatmul.mubr.bf16.gmra.mrb[0].mxu0 %v118
    %v211 = vpop.f32.mrb[0].mxu0
    %v212 = vadd.f32 0.0, %v211
    %v213 = vpop.f32.mrb[0].mxu0
    %v214 = vpop.f32.mrb[0].mxu0
    %v215 = vadd.f32 0.0, %v214
    %v216 = vpop.f32.mrb[0].mxu0
    %217 = vdwg.mxu0
    %v218 = vadd.f32 %v85, %v204
    %v219 = vadd.f32 %v86, %v207
    %v220 = vadd.f32 %v87, %v212
    %v221 = vadd.f32 %v88, %v215
    %222 = vst [vmem:[#allocation2] sm:$0xff] %v218
    %223 = vst [vmem:[#allocation2 + $0x8] sm:$0xff] %v219
    %224 = vst [vmem:[#allocation2 + $0x10] sm:$0xff] %v220
    %225 = vst [vmem:[#allocation2 + $0x18] sm:$0xff] %v221
    // Predicated region
    $region42: #{tpu_custom_call.1} parent=1 // pred_check
      %p226 = pneg %p77
    $region43: #{tpu_custom_call.1} parent=1 // pred_check_branch
      %228 = sbr.rel (%p226) target = $region45
    $region44: #{tpu_custom_call.1} parent=1 // pred_region
      %v229 = vld [vmem:[#allocation2] sm:$0xff]
      %v230 = vld [vmem:[#allocation2 + $0x8] sm:$0xff]
      %v231 = vld [vmem:[#allocation2 + $0x10] sm:$0xff]
      %v232 = vld [vmem:[#allocation2 + $0x18] sm:$0xff]
      %v233 = vmax.f32 %v229, 1.0
      %v234 = vmax.f32 %v230, 1.0
      %v235 = vmax.f32 %v231, 1.0
      %v236 = vmax.f32 %v232, 1.0
      %v237 = vrcp.pop %v233
      %v238 = vrcp.pop %v234
      %v239 = vrcp.pop %v235
      %v240 = vrcp.pop %v236
      %242 = vset.pattern.permute.xlu0 127
      %243 = vperm.xlu0 %242, %v237
      %v244 = vpop.permute.xlu0 %243
      %247 = vset.pattern.permute.xlu0 127
      %248 = vperm.xlu0 %247, %v238
      %v249 = vpop.permute.xlu0 %248
      %252 = vset.pattern.permute.xlu0 127
      %253 = vperm.xlu0 %252, %v239
      %v254 = vpop.permute.xlu0 %253
      %257 = vset.pattern.permute.xlu0 127
      %258 = vperm.xlu0 %257, %v240
      %v259 = vpop.permute.xlu0 %258
      %v261 = vmul.f32 %v229, %v244
      %v262 = vmul.f32 %v230, %v249
      %v263 = vmul.f32 %v231, %v254
      %v264 = vmul.f32 %v232, %v259
      %v265 = vpack.c.bf16 %v262, %v261
      %v266 = vpack.c.bf16 %v264, %v263
      %v267 = vld [vmem:[#allocation8] sm:$0xf]
      %v268 = vld [vmem:[#allocation8 + $0x4] sm:$0xf]
      %v269 = vld [vmem:[#allocation8 + $0x8] sm:$0xf]
      %v270 = vld [vmem:[#allocation8 + $0xc] sm:$0xf]
      %v275 = vunpack.c.l.b16 %v267
      %v276 = vunpack.c.l.b16 %v268
      %v277 = vunpack.c.l.b16 %v269
      %v278 = vunpack.c.l.b16 %v270
      %v279 = vpack.c.b16 %v276, %v275
      %v280 = vpack.c.b16 %v278, %v277
      %v283 = vld [vmem:[#allocation9] sm:$0xf]
      %v284 = vld [vmem:[#allocation9 + $0x4] sm:$0xf]
      %v285 = vld [vmem:[#allocation9 + $0x8] sm:$0xf]
      %v286 = vld [vmem:[#allocation9 + $0xc] sm:$0xf]
      %v287 = vld [vmem:[#allocation9 + $0x10] sm:$0xf]
      %v288 = vld [vmem:[#allocation9 + $0x14] sm:$0xf]
      %v289 = vld [vmem:[#allocation9 + $0x18] sm:$0xf]
      %v290 = vld [vmem:[#allocation9 + $0x1c] sm:$0xf]
      %v291 = vld [vmem:[#allocation9 + $0x20] sm:$0xf]
      %v292 = vld [vmem:[#allocation9 + $0x24] sm:$0xf]
      %v293 = vld [vmem:[#allocation9 + $0x28] sm:$0xf]
      %v294 = vld [vmem:[#allocation9 + $0x2c] sm:$0xf]
      %v295 = vld [vmem:[#allocation9 + $0x30] sm:$0xf]
      %v296 = vld [vmem:[#allocation9 + $0x34] sm:$0xf]
      %v297 = vld [vmem:[#allocation9 + $0x38] sm:$0xf]
      %v298 = vld [vmem:[#allocation9 + $0x3c] sm:$0xf]
      %v299 = vld [vmem:[#allocation9 + $0x40] sm:$0xf]
      %v300 = vld [vmem:[#allocation9 + $0x44] sm:$0xf]
      %v301 = vld [vmem:[#allocation9 + $0x48] sm:$0xf]
      %v302 = vld [vmem:[#allocation9 + $0x4c] sm:$0xf]
      %v303 = vld [vmem:[#allocation9 + $0x50] sm:$0xf]
      %v304 = vld [vmem:[#allocation9 + $0x54] sm:$0xf]
      %v305 = vld [vmem:[#allocation9 + $0x58] sm:$0xf]
      %v306 = vld [vmem:[#allocation9 + $0x5c] sm:$0xf]
      %v307 = vld [vmem:[#allocation9 + $0x60] sm:$0xf]
      %v308 = vld [vmem:[#allocation9 + $0x64] sm:$0xf]
      %v309 = vld [vmem:[#allocation9 + $0x68] sm:$0xf]
      %v310 = vld [vmem:[#allocation9 + $0x6c] sm:$0xf]
      %v311 = vld [vmem:[#allocation9 + $0x70] sm:$0xf]
      %v312 = vld [vmem:[#allocation9 + $0x74] sm:$0xf]
      %v313 = vld [vmem:[#allocation9 + $0x78] sm:$0xf]
      %v314 = vld [vmem:[#allocation9 + $0x7c] sm:$0xf]
      %v315 = vld [vmem:[%s4] sm:$0x1]
      %v317 = vlaneseq
      %v318 = vshrl.u32 %v317, 7
      %v319 = vsub.s32 0, %v318
      %v320 = vrot.slane %v315, %v319
      %v354 = vunpack.c.l.b16 %v283
      %v355 = vunpack.c.l.b16 %v284
      %v356 = vunpack.c.l.b16 %v285
      %v357 = vunpack.c.l.b16 %v286
      %v358 = vunpack.c.l.b16 %v287
      %v359 = vunpack.c.l.b16 %v288
      %v360 = vunpack.c.l.b16 %v289
      %v361 = vunpack.c.l.b16 %v290
      %v362 = vunpack.c.l.b16 %v291
      %v363 = vunpack.c.l.b16 %v292
      %v364 = vunpack.c.l.b16 %v293
      %v365 = vunpack.c.l.b16 %v294
      %v366 = vunpack.c.l.b16 %v295
      %v367 = vunpack.c.l.b16 %v296
      %v368 = vunpack.c.l.b16 %v297
      %v369 = vunpack.c.l.b16 %v298
      %v370 = vunpack.c.l.b16 %v299
      %v371 = vunpack.c.l.b16 %v300
      %v372 = vunpack.c.l.b16 %v301
      %v373 = vunpack.c.l.b16 %v302
      %v374 = vunpack.c.l.b16 %v303
      %v375 = vunpack.c.l.b16 %v304
      %v376 = vunpack.c.l.b16 %v305
      %v377 = vunpack.c.l.b16 %v306
      %v378 = vunpack.c.l.b16 %v307
      %v379 = vunpack.c.l.b16 %v308
      %v380 = vunpack.c.l.b16 %v309
      %v381 = vunpack.c.l.b16 %v310
      %v382 = vunpack.c.l.b16 %v311
      %v383 = vunpack.c.l.b16 %v312
      %v384 = vunpack.c.l.b16 %v313
      %v385 = vunpack.c.l.b16 %v314
      %v386 = vpack.c.b16 %v355, %v354
      %v387 = vpack.c.b16 %v357, %v356
      %v388 = vpack.c.b16 %v359, %v358
      %v389 = vpack.c.b16 %v361, %v360
      %v390 = vpack.c.b16 %v363, %v362
      %v391 = vpack.c.b16 %v365, %v364
      %v392 = vpack.c.b16 %v367, %v366
      %v393 = vpack.c.b16 %v369, %v368
      %v394 = vpack.c.b16 %v371, %v370
      %v395 = vpack.c.b16 %v373, %v372
      %v396 = vpack.c.b16 %v375, %v374
      %v397 = vpack.c.b16 %v377, %v376
      %v398 = vpack.c.b16 %v379, %v378
      %v399 = vpack.c.b16 %v381, %v380
      %v400 = vpack.c.b16 %v383, %v382
      %v401 = vpack.c.b16 %v385, %v384
      %418 = vmatprep.subr.bf16.mxu0 0
      %419 = vmatpush1.bf16.msra.mxu0 %v386
      %420 = vmatprep.subr.bf16.mxu0 0
      %421 = vmatpush1.bf16.msra.mxu0 %v387
      %422 = vmatprep.subr.bf16.mxu0 0
      %423 = vmatpush1.bf16.msra.mxu0 %v388
      %424 = vmatprep.subr.bf16.mxu0 0
      %425 = vmatpush1.bf16.msra.mxu0 %v389
      %426 = vmatprep.subr.bf16.mxu0 0
      %427 = vmatpush1.bf16.msra.mxu0 %v390
      %428 = vmatprep.subr.bf16.mxu0 0
      %429 = vmatpush1.bf16.msra.mxu0 %v391
      %430 = vmatprep.subr.bf16.mxu0 0
      %431 = vmatpush1.bf16.msra.mxu0 %v392
      %432 = vmatprep.subr.bf16.mxu0 0
      %433 = vmatpush1.bf16.msra.mxu0 %v393
      %434 = vmatprep.subr.bf16.mxu0 0
      %435 = vmatpush1.bf16.msra.mxu0 %v394
      %436 = vmatprep.subr.bf16.mxu0 0
      %437 = vmatpush1.bf16.msra.mxu0 %v395
      %438 = vmatprep.subr.bf16.mxu0 0
      %439 = vmatpush1.bf16.msra.mxu0 %v396
      %440 = vmatprep.subr.bf16.mxu0 0
      %441 = vmatpush1.bf16.msra.mxu0 %v397
      %442 = vmatprep.subr.bf16.mxu0 0
      %443 = vmatpush1.bf16.msra.mxu0 %v398
      %444 = vmatprep.subr.bf16.mxu0 0
      %445 = vmatpush1.bf16.msra.mxu0 %v399
      %446 = vmatprep.subr.bf16.mxu0 0
      %447 = vmatpush1.bf16.msra.mxu0 %v400
      %448 = vmatprep.subr.bf16.mxu0 0
      %449 = vmatpush1.bf16.msra.mxu0 %v401
      %450 = vmatprep.mubr.bf16.mxu0 %v279
      %451 = vmatmul.mubr.bf16.gmra.mrb[0].mxu0 %v265
      %v452 = vpop.f32.mrb[0].mxu0
      %v453 = vadd.f32 %v320, %v452
      %v454 = vpop.f32.mrb[0].mxu0
      %v455 = vpop.f32.mrb[0].mxu0
      %v456 = vadd.f32 %v320, %v455
      %v457 = vpop.f32.mrb[0].mxu0
      %458 = vmatprep.mubr.bf16.mxu0 %v280
      %459 = vmatmul.mubr.bf16.gmra.mrb[0].mxu0 %v266
      %v460 = vpop.f32.mrb[0].mxu0
      %v461 = vadd.f32 %v320, %v460
      %v462 = vpop.f32.mrb[0].mxu0
      %v463 = vpop.f32.mrb[0].mxu0
      %v464 = vadd.f32 %v320, %v463
      %v465 = vpop.f32.mrb[0].mxu0
      %466 = vdwg.mxu0
      %v467 = vmax.f32 %v453, 0.0
      %v468 = vmax.f32 %v456, 0.0
      %v469 = vmax.f32 %v461, 0.0
      %v470 = vmax.f32 %v464, 0.0
      %v471 = vpack.c.bf16 %v468, %v467
      %v472 = vpack.c.bf16 %v470, %v469
      %v475 = vunpack.c.l.b16 %v471
      %v476 = vunpack.c.h.b16 %v471
      %v477 = vunpack.c.l.b16 %v472
      %v478 = vunpack.c.h.b16 %v472
      %v479 = vpack.c.b16 %v475, %v475
      %v480 = vpack.c.b16 %v476, %v476
      %v481 = vpack.c.b16 %v477, %v477
      %v482 = vpack.c.b16 %v478, %v478
      %487 = vst [vmem:[#allocation11] sm:$0xf] %v479
      %488 = vst [vmem:[#allocation11 + $0x4] sm:$0xf] %v480
      %489 = vst [vmem:[#allocation11 + $0x8] sm:$0xf] %v481
      %490 = vst [vmem:[#allocation11 + $0xc] sm:$0xf] %v482
    $region45: #{tpu_custom_call.1} parent=1 // pred_fallthru
      _
    // Predicated region
    $region46: #{tpu_custom_call.1} parent=1 // pred_check
      _
    $region47: #{tpu_custom_call.1} parent=1 // pred_check_branch
      %492 = sbr.rel (0) target = $region49
    $region48: #{tpu_custom_call.1} parent=1 // pred_region
      %s494 = ssub.s32 256, 256
      %495 = vsyncadd [#allocation5], %s494
      %s496 = sshll.u32 [#allocation11], 4
      %s497 = int_to_ptr.vmem [resolvable:$true] %s496
      %502 = dma.vmem_to_hbm [thread:$0]  %s497, 256, %s5, [#allocation5], 64, 64, 4
    $region49: #{tpu_custom_call.1} parent=1 // pred_fallthru
      _
    // Predicated region
    $region50: #{tpu_custom_call.1} parent=1 // pred_check
      _
    $region51: #{tpu_custom_call.1} parent=1 // pred_check_branch
      %504 = sbr.rel (0) target = $region53
    $region52: #{tpu_custom_call.1} parent=1 // pred_region
      %505 = dma.done [#allocation5], 256
    $region53: #{tpu_custom_call.1} parent=1 // pred_fallthru
      _
    %506 = vsyncpa [#allocation4], 1
    %507 = vsyncpa [#allocation7], 1
    %508 = vsyncpa [#allocation10], 1
    %509 = vsyncpa [#allocation5], 1

</llo_original>
